<compile_context>
chip_gen: v6e
topology: v6e:2x2x1
jax: 0.10.0
libtpu: 0.0.40
codegen_flags: <defaults>
</compile_context>

<pallas_src>
import functools
import math

import jax
import jax.numpy as jnp
from jax.experimental import pallas as pl
from jax.experimental.pallas import tpu as pltpu


def _round_up(x, m):
    return ((x + m - 1) // m) * m


def _vmem_budget_bytes():
    """Per-generation VMEM budget for one grid step (double-buffered blocks +
    f32 softmax temporaries), leaving headroom below physical VMEM."""
    cap = 64 << 20  # conservative default (v7x per-TensorCore VMEM)
    try:
        info = pltpu.get_tpu_info()
        for name in ("vmem_capacity_bytes", "vmem_bytes", "vmem_size_bytes"):
            val = getattr(info, name, None)
            if val:
                cap = int(val)
                break
    except Exception:
        pass
    if cap >= (128 << 20):
        return 100 << 20                      # v5e / v6e: 128 MiB physical
    return max(cap - (12 << 20), cap // 2)    # v7x (64 MiB) and smaller parts


def _choose_tiles(B, Nt_p, Ns_p, E, in_item, out_item, mask_item, budget):
    """Pick (batch block BB, query tile TQ) so one grid step fits the budget,
    while keeping >= 2 grid steps whenever the problem has that much work."""

    def per_batch(tq):
        b = 2 * (tq * E * in_item            # q block (double-buffered)
                 + 2 * Ns_p * E * in_item    # k, v blocks
                 + tq * E * out_item         # out block
                 + tq * Ns_p * out_item)     # attn block (dominant stream)
        if mask_item:
            b += 2 * tq * Ns_p * mask_item   # mask block
        b += 2 * tq * Ns_p * 4               # live f32 score / exp temporaries
        return b

    cands = [Nt_p] + [t for t in (2048, 1024, 512, 256, 128, 64, 32, 16, 8)
                      if t < Nt_p]
    TQ = cands[-1]
    for t in cands:                          # largest tile that fits VMEM
        if per_batch(t) <= budget:
            TQ = t
            break

    n_q = pl.cdiv(Nt_p, TQ)
    BB = 1
    for d in range(B, 0, -1):                # largest batch block that fits
        if B % d:
            continue
        if d * per_batch(TQ) > budget:
            continue
        if (B // d) * n_q < 2 and B * n_q >= 2:
            continue                         # keep both v7x TensorCores busy
        BB = d
        break

    # B == 1 with a single query tile: split the query axis across cores.
    if (B // BB) * pl.cdiv(Nt_p, TQ) < 2 and Nt_p > 8:
        TQ = max(8, _round_up(pl.cdiv(Nt_p, 2), 8))
    return BB, TQ


def _normalize_mask(mask, B, Nt, Ns, Nt_p, Ns_p, dtype):
    """Bring the mask to 3D in the input dtype, pad only the axes that match
    Nt / Ns, and report which axes actually vary (for the BlockSpec)."""
    m = jnp.asarray(mask, dtype=dtype)
    if m.ndim > 3:
        raise ValueError("mask must be broadcastable to (B, Nt, Ns)")
    while m.ndim < 3:
        m = m[None]
    mb, mt, ms = m.shape
    if mb not in (1, B) or mt not in (1, Nt) or ms not in (1, Ns):
        raise ValueError(f"mask shape {m.shape} not broadcastable to "
                         f"{(B, Nt, Ns)}")
    pad_t = (Nt_p - Nt) if mt == Nt else 0
    pad_s = (Ns_p - Ns) if ms == Ns else 0
    if pad_t or pad_s:
        m = jnp.pad(m, ((0, 0), (0, pad_t), (0, pad_s)))
    return m, mb == B, mt == Nt


def _mask_index_map(batch_varies, q_varies):
    def idx(bi, qi):
        return (bi if batch_varies else 0, qi if q_varies else 0, 0)
    return idx


def _sdpa_kernel(*refs, ns_valid, has_mask):
    """q: (BB,TQ,E), k/v: (BB,Ns_p,E), optional mask block, out/attn outputs."""
    if has_mask:
        q_ref, k_ref, v_ref, mask_ref, out_ref, attn_ref = refs
    else:
        q_ref, k_ref, v_ref, out_ref, attn_ref = refs

    e = q_ref.shape[-1]
    scale = 1.0 / math.sqrt(e)

    # Fold 1/sqrt(E) into the small q tile (input dtype; weak python scalar
    # keeps bf16 as bf16) instead of the (TQ, Ns) score matrix.
    q = q_ref[...] * scale

    # scores = q @ k^T -> (BB, TQ, Ns); one batched dot_general on the MXU
    # contracting the embed dim (no explicit transpose), f32 accumulation.
    s = jnp.einsum("bqd,bkd->bqk", q, k_ref[...],
                   preferred_element_type=jnp.float32)
    if has_mask:
        s = s + mask_ref[...].astype(jnp.float32)   # additive mask, f32 math
    if ns_valid is not None:
        # Key columns that only exist because Ns was padded to a lane multiple.
        col = jax.lax.broadcasted_iota(jnp.int32, s.shape, dimension=2)
        s = jnp.where(col < ns_valid, s, jnp.float32(-1e30))

    # Numerically stable softmax over the key axis (f32 throughout).
    m = jnp.max(s, axis=-1, keepdims=True)
    p = jnp.exp(s - m)
    denom = jnp.sum(p, axis=-1, keepdims=True)
    # EUP approximate reciprocal (~free slot); rows sum to 1 only to ~1e-3.
    attn = (p * pl.reciprocal(denom, approx=True)).astype(attn_ref.dtype)
    attn_ref[...] = attn

    # TODO(synk): nn.Dropout(attn_dropout) is identity in eval mode; training
    # dropout (pltpu.prng_seed + prng_random_bits mask) is not implemented.

    # out = attn @ v -> (BB, TQ, E); probabilities already in the output dtype
    # so the MXU runs at bf16 rate for bf16 inputs, f32 accumulation kept.
    out = jnp.einsum("bqk,bkd->bqd", attn.astype(v_ref.dtype), v_ref[...],
                     preferred_element_type=jnp.float32)
    out_ref[...] = out.astype(out_ref.dtype)


def scaled_dot_product_attention(q, k, v, mask=None):
    """q: (B, Nt, E), k/v: (B, Ns, E), mask: None or broadcastable to
    (B, Nt, Ns).  Returns (output, attn) exactly like the PyTorch module."""
    B, Nt, E = q.shape
    Ns = k.shape[1]
    out_dtype = q.dtype
    in_item = jnp.dtype(q.dtype).itemsize
    out_item = jnp.dtype(out_dtype).itemsize

    # Lane/sublane-friendly padding: Nt -> multiple of 8, Ns -> multiple of
    # 128 so the dominant (B, Nt, Ns) attn writeback is an unmasked vst.
    # TODO(synk): E < 128 still leaves the small (B, Nt, E) out store
    # lane-masked; callers chasing peak store BW should fold heads so the last
    # dim is a multiple of 128.
    Nt_p = _round_up(Nt, 8)
    Ns_p = _round_up(Ns, 128)
    if Nt_p != Nt:
        q = jnp.pad(q, ((0, 0), (0, Nt_p - Nt), (0, 0)))
    if Ns_p != Ns:
        pad = ((0, 0), (0, Ns_p - Ns), (0, 0))
        k = jnp.pad(k, pad)
        v = jnp.pad(v, pad)

    mask_arr = None
    mask_item = 0
    batch_varies = q_varies = False
    if mask is not None:
        mask_arr, batch_varies, q_varies = _normalize_mask(
            mask, B, Nt, Ns, Nt_p, Ns_p, q.dtype)
        mask_item = jnp.dtype(mask_arr.dtype).itemsize

    budget = _vmem_budget_bytes()
    BB, TQ = _choose_tiles(B, Nt_p, Ns_p, E, in_item, out_item, mask_item,
                           budget)
    grid = (B // BB, pl.cdiv(Nt_p, TQ))

    q_spec = pl.BlockSpec((BB, TQ, E), lambda bi, qi: (bi, qi, 0))
    kv_spec = pl.BlockSpec((BB, Ns_p, E), lambda bi, qi: (bi, 0, 0))
    out_spec = pl.BlockSpec((BB, TQ, E), lambda bi, qi: (bi, qi, 0))
    attn_spec = pl.BlockSpec((BB, TQ, Ns_p), lambda bi, qi: (bi, qi, 0))

    in_specs = [q_spec, kv_spec, kv_spec]
    args = [q, k, v]
    if mask_arr is not None:
        mask_spec = pl.BlockSpec(
            (BB if batch_varies else 1,
             TQ if q_varies else 1,
             mask_arr.shape[2]),
            _mask_index_map(batch_varies, q_varies))
        in_specs.append(mask_spec)
        args.append(mask_arr)

    kernel = functools.partial(
        _sdpa_kernel,
        ns_valid=Ns if Ns_p != Ns else None,
        has_mask=mask_arr is not None)

    grid_spec = pltpu.PrefetchScalarGridSpec(
        num_scalar_prefetch=0,
        grid=grid,
        in_specs=in_specs,
        out_specs=[out_spec, attn_spec],
    )

    out, attn = pl.pallas_call(
        kernel,
        out_shape=(
            jax.ShapeDtypeStruct((B, Nt_p, E), out_dtype),
            jax.ShapeDtypeStruct((B, Nt_p, Ns_p), out_dtype),
        ),
        grid_spec=grid_spec,
        compiler_params=pltpu.CompilerParams(
            dimension_semantics=("parallel", "parallel"),
            vmem_limit_bytes=int(budget),
        ),
    )(*args)

    # Slice off the lane/sublane padding (no-op when the shapes were aligned).
    if Nt_p != Nt:
        out = out[:, :Nt, :]
    if Nt_p != Nt or Ns_p != Ns:
        attn = attn[:, :Nt, :Ns]
    return out, attn


def _reference(q, k, v, mask=None):
    B, Nt, E = q.shape
    qs = q / math.sqrt(E)
    attn = jnp.einsum("bte,bse->bts", qs, k)
    if mask is not None:
        attn = attn + mask
    attn = jax.nn.softmax(attn, axis=-1)
    out = jnp.einsum("bts,bse->bte", attn, v)
    return out, attn


if __name__ == "__main__":
    key = jax.random.PRNGKey(0)
    kq, kk, kv, kq3, kk3, kv3 = jax.random.split(key, 6)

    # Case 1: masked path (2D broadcast mask; Ns padded 8 -> 128 internally).
    B, Nt, Ns, E = 2, 8, 8, 32
    q = jax.random.normal(kq, (B, Nt, E), dtype=jnp.float32)
    k = jax.random.normal(kk, (B, Ns, E), dtype=jnp.float32)
    v = jax.random.normal(kv, (B, Ns, E), dtype=jnp.float32)
    causal = jnp.where(
        jnp.arange(Nt)[:, None] >= jnp.arange(Ns)[None, :], 0.0, -1e9
    ).astype(jnp.float32)

    out, attn = scaled_dot_product_attention(q, k, v, causal)
    jax.block_until_ready((out, attn))
    ref_out, ref_attn = _reference(q, k, v, causal)
    assert out.shape == ref_out.shape and attn.shape == ref_attn.shape
    # Tolerance covers the EUP approximate-reciprocal softmax normalisation.
    assert jnp.allclose(out, ref_out, atol=5e-3, rtol=5e-3)
    assert jnp.allclose(attn, ref_attn, atol=5e-3, rtol=5e-3)

    # Case 2: no-mask fast path (no mask array DMA'd at all).
    out2, attn2 = scaled_dot_product_attention(q, k, v, None)
    jax.block_until_ready((out2, attn2))
    ref_out2, ref_attn2 = _reference(q, k, v, None)
    assert jnp.allclose(out2, ref_out2, atol=5e-3, rtol=5e-3)
    assert jnp.allclose(attn2, ref_attn2, atol=5e-3, rtol=5e-3)

    # Case 3: unaligned Nt/Ns and B=1 (exercises Nt padding, key-column
    # masking of the padded lanes, and the query-axis split for megacore).
    B3, Nt3, Ns3, E3 = 1, 10, 12, 16
    q3 = jax.random.normal(kq3, (B3, Nt3, E3), dtype=jnp.float32)
    k3 = jax.random.normal(kk3, (B3, Ns3, E3), dtype=jnp.float32)
    v3 = jax.random.normal(kv3, (B3, Ns3, E3), dtype=jnp.float32)
    mask3 = jnp.where(
        jnp.arange(Nt3)[:, None] >= jnp.arange(Ns3)[None, :], 0.0, -1e9
    ).astype(jnp.float32)[None]  # (1, Nt3, Ns3)

    out3, attn3 = scaled_dot_product_attention(q3, k3, v3, mask3)
    jax.block_until_ready((out3, attn3))
    ref_out3, ref_attn3 = _reference(q3, k3, v3, mask3)
    assert out3.shape == ref_out3.shape and attn3.shape == ref_attn3.shape
    assert jnp.allclose(out3, ref_out3, atol=5e-3, rtol=5e-3)
    assert jnp.allclose(attn3, ref_attn3, atol=5e-3, rtol=5e-3)

    print("KERNEL_OK")
</pallas_src>

<mosaic_0001>
module attributes {stable_mosaic.version = 11 : i64} {
  func.func @_sdpa_kernel(%arg0: i32, %arg1: i32, %arg2: memref<1x8x32xf32, #tpu.memory_space<vmem>>, %arg3: memref<1x128x32xf32, #tpu.memory_space<vmem>>, %arg4: memref<1x128x32xf32, #tpu.memory_space<vmem>>, %arg5: memref<1x8x128xf32, #tpu.memory_space<vmem>>, %arg6: memref<1x8x32xf32, #tpu.memory_space<vmem>>, %arg7: memref<1x8x128xf32, #tpu.memory_space<vmem>>) attributes {dimension_semantics = [#tpu.dimension_semantics<parallel>, #tpu.dimension_semantics<parallel>], iteration_bounds = array<i64: 2, 1>, scalar_prefetch = 0 : i64, scratch_operands = 0 : i64, tpu.core_type = #tpu.core_type<tc>, window_params = [{transform_indices = @transform_0, window_bounds = array<i64: 1, 8, 32>}, {transform_indices = @transform_1, window_bounds = array<i64: 1, 128, 32>}, {transform_indices = @transform_2, window_bounds = array<i64: 1, 128, 32>}, {transform_indices = @transform_3, window_bounds = array<i64: 1, 8, 128>}, {transform_indices = @transform_4, window_bounds = array<i64: 1, 8, 32>}, {transform_indices = @transform_5, window_bounds = array<i64: 1, 8, 128>}]} {
    %c0 = arith.constant 0 : index
    %c0_0 = arith.constant 0 : index
    %c0_1 = arith.constant 0 : index
    %0 = vector.load %arg2[%c0, %c0_0, %c0_1] : memref<1x8x32xf32, #tpu.memory_space<vmem>>, vector<1x8x32xf32>
    %cst = arith.constant 0.176776692 : f32
    %1 = vector.broadcast %cst : f32 to vector<1x8x32xf32>
    %2 = arith.mulf %0, %1 : vector<1x8x32xf32>
    %c0_2 = arith.constant 0 : index
    %c0_3 = arith.constant 0 : index
    %c0_4 = arith.constant 0 : index
    %3 = vector.load %arg3[%c0_2, %c0_3, %c0_4] : memref<1x128x32xf32, #tpu.memory_space<vmem>>, vector<1x128x32xf32>
    "tpu.trace_start"() <{level = 10 : i32, message = "bqd,bkd->bqk"}> : () -> ()
    %cst_5 = arith.constant dense<0.000000e+00> : vector<1x8x128xf32>
    %4 = tpu.matmul %2, %3, %cst_5 {dimension_numbers = #tpu.dot_dimension_numbers<[2], [2], [1], [1], [0, 0, 0, 1, 1, 1], [0], [0]>} : vector<1x8x32xf32>, vector<1x128x32xf32>, vector<1x8x128xf32> -> vector<1x8x128xf32>
    "tpu.trace_stop"() : () -> ()
    %c0_6 = arith.constant 0 : index
    %c0_7 = arith.constant 0 : index
    %c0_8 = arith.constant 0 : index
    %5 = vector.load %arg5[%c0_6, %c0_7, %c0_8] : memref<1x8x128xf32, #tpu.memory_space<vmem>>, vector<1x8x128xf32>
    %6 = arith.addf %4, %5 : vector<1x8x128xf32>
    %7 = tpu.iota {dimensions = array<i32: 2>} : vector<1x8x128xi32>
    %c8_i32 = arith.constant 8 : i32
    %8 = vector.broadcast %c8_i32 : i32 to vector<1x8x128xi32>
    %9 = arith.cmpi slt, %7, %8 : vector<1x8x128xi32>
    %cst_9 = arith.constant -1.000000e+30 : f32
    %10 = vector.broadcast %cst_9 : f32 to vector<1x8x128xf32>
    %11 = arith.select %9, %6, %10 : vector<1x8x128xi1>, vector<1x8x128xf32>
    %cst_10 = arith.constant dense<0xFF800000> : vector<1x8xf32>
    %12 = vector.multi_reduction <maximumf>, %11, %cst_10 [2] : vector<1x8x128xf32> to vector<1x8xf32>
    %13 = vector.shape_cast %12 : vector<1x8xf32> to vector<1x8x1xf32>
    %14 = vector.broadcast %13 : vector<1x8x1xf32> to vector<1x8x128xf32>
    %15 = arith.subf %11, %14 : vector<1x8x128xf32>
    %16 = math.exp %15 : vector<1x8x128xf32>
    %cst_11 = arith.constant dense<0.000000e+00> : vector<1x8xf32>
    %17 = vector.multi_reduction <add>, %16, %cst_11 [2] : vector<1x8x128xf32> to vector<1x8xf32>
    %18 = vector.shape_cast %17 : vector<1x8xf32> to vector<1x8x1xf32>
    %19 = tpu.reciprocal %18 {approx = true} : vector<1x8x1xf32> -> vector<1x8x1xf32>
    %20 = vector.broadcast %19 : vector<1x8x1xf32> to vector<1x8x128xf32>
    %21 = arith.mulf %16, %20 : vector<1x8x128xf32>
    %c0_12 = arith.constant 0 : index
    %c0_13 = arith.constant 0 : index
    %c0_14 = arith.constant 0 : index
    %22 = vector.load %arg7[%c0_12, %c0_13, %c0_14] : memref<1x8x128xf32, #tpu.memory_space<vmem>>, vector<1x8x128xf32>
    tpu.vector_store %arg7[%c0_12, %c0_13, %c0_14], %21 {strides = array<i32>} : memref<1x8x128xf32, #tpu.memory_space<vmem>>, vector<1x8x128xf32>,
    %c0_15 = arith.constant 0 : index
    %c0_16 = arith.constant 0 : index
    %c0_17 = arith.constant 0 : index
    %23 = vector.load %arg4[%c0_15, %c0_16, %c0_17] : memref<1x128x32xf32, #tpu.memory_space<vmem>>, vector<1x128x32xf32>
    "tpu.trace_start"() <{level = 10 : i32, message = "bqk,bkd->bqd"}> : () -> ()
    %cst_18 = arith.constant dense<0.000000e+00> : vector<1x8x32xf32>
    %24 = tpu.matmul %21, %23, %cst_18 {dimension_numbers = #tpu.dot_dimension_numbers<[2], [1], [1], [2], [0, 0, 0, 1, 1, 2], [0], [0]>} : vector<1x8x128xf32>, vector<1x128x32xf32>, vector<1x8x32xf32> -> vector<1x8x32xf32>
    "tpu.trace_stop"() : () -> ()
    %c0_19 = arith.constant 0 : index
    %c0_20 = arith.constant 0 : index
    %c0_21 = arith.constant 0 : index
    %25 = vector.load %arg6[%c0_19, %c0_20, %c0_21] : memref<1x8x32xf32, #tpu.memory_space<vmem>>, vector<1x8x32xf32>
    tpu.vector_store %arg6[%c0_19, %c0_20, %c0_21], %24 {strides = array<i32>} : memref<1x8x32xf32, #tpu.memory_space<vmem>>, vector<1x8x32xf32>,
    return
  }
  func.func @transform_0(%arg0: i32, %arg1: i32) -> (i32, i32, i32) {
    %c0_i32 = arith.constant 0 : i32
    %c0_i32_0 = arith.constant 0 : i32
    return %arg0, %arg1, %c0_i32 : i32, i32, i32
  }
  func.func @transform_1(%arg0: i32, %arg1: i32) -> (i32, i32, i32) {
    %c0_i32 = arith.constant 0 : i32
    %c0_i32_0 = arith.constant 0 : i32
    %c0_i32_1 = arith.constant 0 : i32
    return %arg0, %c0_i32, %c0_i32_0 : i32, i32, i32
  }
  func.func @transform_2(%arg0: i32, %arg1: i32) -> (i32, i32, i32) {
    %c0_i32 = arith.constant 0 : i32
    %c0_i32_0 = arith.constant 0 : i32
    %c0_i32_1 = arith.constant 0 : i32
    return %arg0, %c0_i32, %c0_i32_0 : i32, i32, i32
  }
  func.func @transform_3(%arg0: i32, %arg1: i32) -> (i32, i32, i32) {
    %c0_i32 = arith.constant 0 : i32
    %c0_i32_0 = arith.constant 0 : i32
    %c0_i32_1 = arith.constant 0 : i32
    return %c0_i32, %arg1, %c0_i32_0 : i32, i32, i32
  }
  func.func @transform_4(%arg0: i32, %arg1: i32) -> (i32, i32, i32) {
    %c0_i32 = arith.constant 0 : i32
    %c0_i32_0 = arith.constant 0 : i32
    return %arg0, %arg1, %c0_i32 : i32, i32, i32
  }
  func.func @transform_5(%arg0: i32, %arg1: i32) -> (i32, i32, i32) {
    %c0_i32 = arith.constant 0 : i32
    %c0_i32_0 = arith.constant 0 : i32
    return %arg0, %arg1, %c0_i32 : i32, i32, i32
  }
}

</mosaic_0001>

<llo_original>
// kernel: tpu_custom_call.1
$region0: #{tpu_custom_call.1}
  #allocation0 [shape = 'u32[]', space=smem, size = 0x4, offset = 0x4, fixed_abs, tag = 'smem constant byte address 0x4 - core index']
  #allocation1 [shape = 'u32[144,128]{1,0:T(1,128)}', space=vmem, size = 0x12000, scoped, tag = 'internal scratch']
  %s0 = inlined_call_operand.vmem [shape: f32[2,8,32], index: 0, kind: input, shape index: {}]
  %s1 = inlined_call_operand.vmem [shape: f32[2,128,32], index: 1, kind: input, shape index: {}]
  %s2 = inlined_call_operand.vmem [shape: f32[2,128,32], index: 2, kind: input, shape index: {}]
  %s3 = inlined_call_operand.vmem [shape: f32[1,8,128], index: 3, kind: input, shape index: {}]
  %s4 = inlined_call_operand.hbm [shape: f32[2,8,32], index: 4, kind: output, shape index: {0}]
  %s5 = inlined_call_operand.hbm [shape: f32[2,8,128], index: 5, kind: output, shape index: {1}]
  %6 = xla_tuple %s4, %s5
  %s7 = sld [smem:[#allocation0]]
  $region57: #{tpu_custom_call.1} parent=0
    _
  %s9 = ssub.s32 1, %s7
  %s10 = scalar_select 0, %s9, %s7
  $region1: #{tpu_custom_call.1} parent=0
    #allocation2 [shape = 'u8[8192]{0}', space=vmem, size = 0x2000, scoped, tag = 'output window, operand 0']
    #allocation3 [shape = 's32[2]{0}', space=sflag, size = 0x8, scoped, tag = 'scoped memory for tpu_custom_call.1']
    #allocation4 [shape = 'u8[8192]{0}', space=vmem, size = 0x2000, scoped, tag = 'output window, operand 1']
    #allocation5 [shape = 's32[2]{0}', space=sflag, size = 0x8, scoped, tag = 'scoped memory for tpu_custom_call.1']
    %11 = vsyncpa [#allocation3], 0
    %s12 = scalar_lea.sflag [#allocation3], 1
    %13 = vsyncpa %s12, 0
    %14 = vsyncpa [#allocation5], 0
    %s15 = scalar_lea.sflag [#allocation5], 1
    %16 = vsyncpa %s15, 0
    loop: start=0, step=1, limit=4
    $region2: #{tpu_custom_call.1} parent=1 // loop_pre_header
      _
    $region3: #{tpu_custom_call.1} parent=1 // loop_header
      %s18 = sphi 0, %s22
      %p19 = scmp.ge.s32.totalorder %s18, 4
      %s25 = sphi 0, %s37
      %s26 = sphi 0, %s33
      %s27 = sphi 0, %s25
      %s28 = sphi 0, %s26
      %s29 = sphi 0, %s27
      %s30 = sphi 0, %s28
      %s42 = sphi 0, %s44
      %s45 = sphi 0, %s42
      %s46 = sphi 0, %s45
      %s62 = sphi 0, %s46
      %s68 = sphi 0, %s70
      %s71 = sphi 0, %s68
      %s72 = sphi 0, %s71
      %s88 = sphi 0, %s72
      %s94 = sphi 0, %s96
      %s97 = sphi 0, %s94
      %s98 = sphi 0, %s97
      %s114 = sphi 0, %s98
      %s120 = sphi 0, %s122
      %s123 = sphi 0, %s120
      %s124 = sphi 0, %s123
      %s140 = sphi 0, %s124
      %s148 = sphi 0, %s150
      %s151 = sphi 0, %s148
      %s152 = sphi 0, %s151
      %s168 = sphi 0, %s152
      %s176 = sphi 0, %s178
      %s179 = sphi 0, %s176
      %s180 = sphi 0, %s179
      %s196 = sphi 0, %s180
    $region4: #{tpu_custom_call.1} parent=1 // loop_header_branch
      %21 = sbr.rel (%p19) target = $region8
    $region5: #{tpu_custom_call.1} parent=1 // loop_body
      %s23 = ssub.s32 %s18, 1
      %s24 = ssub.s32 %s18, 2
      %s31 = sadd.s32 1, %s26
      %p32 = scmp.ge.s32.totalorder %s31, 1
      %s33 = scalar_select %p32, 0, %s31
      %s34 = sadd.s32 1, %s25
      %s35 = scalar_select %p32, %s34, %s25
      %p36 = scmp.ge.s32.totalorder %s35, 2
      %s37 = scalar_select %p36, 0, %s35
      %s38 = ssub.s32 %s25, %s37
      %s39 = ssub.s32 %s26, %s33
      %s40 = sor.u32 %s38, %s39
      %p41 = scmp.eq.s32.totalorder %s40, 0
      %s43 = sadd.s32 %s42, 1
      %s44 = scalar_select %p41, %s42, %s43
      %p47 = pneg %p41
      %p48 = scmp.eq.s32.totalorder %s18, 1
      %p49 = por %p47, %p48
      %p50 = scmp.ne.s32.totalorder %s42, %s45
      %p51 = scmp.eq.s32.totalorder %s18, 0
      %p52 = por %p50, %p51
      %p53 = scmp.ne.s32.totalorder %s42, %s45
      %p54 = scmp.eq.s32.totalorder %s23, 1
      %p55 = por %p53, %p54
      %p56 = scmp.ne.s32.totalorder %s45, %s46
      %p57 = scmp.eq.s32.totalorder %s23, 0
      %p58 = por %p56, %p57
      %p59 = scmp.ne.s32.totalorder %s45, %s46
      %p60 = scmp.eq.s32.totalorder %s24, 1
      %p61 = por %p59, %p60
      %p63 = scmp.ne.s32.totalorder %s46, %s62
      %p64 = scmp.eq.s32.totalorder %s24, 0
      %p65 = por %p63, %p64
      %s66 = ssub.s32 %s25, %s37
      %p67 = scmp.eq.s32.totalorder %s66, 0
      %s69 = sadd.s32 %s68, 1
      %s70 = scalar_select %p67, %s68, %s69
      %p73 = pneg %p67
      %p74 = scmp.eq.s32.totalorder %s18, 1
      %p75 = por %p73, %p74
      %p76 = scmp.ne.s32.totalorder %s68, %s71
      %p77 = scmp.eq.s32.totalorder %s18, 0
      %p78 = por %p76, %p77
      %p79 = scmp.ne.s32.totalorder %s68, %s71
      %p80 = scmp.eq.s32.totalorder %s23, 1
      %p81 = por %p79, %p80
      %p82 = scmp.ne.s32.totalorder %s71, %s72
      %p83 = scmp.eq.s32.totalorder %s23, 0
      %p84 = por %p82, %p83
      %p85 = scmp.ne.s32.totalorder %s71, %s72
      %p86 = scmp.eq.s32.totalorder %s24, 1
      %p87 = por %p85, %p86
      %p89 = scmp.ne.s32.totalorder %s72, %s88
      %p90 = scmp.eq.s32.totalorder %s24, 0
      %p91 = por %p89, %p90
      %s92 = ssub.s32 %s25, %s37
      %p93 = scmp.eq.s32.totalorder %s92, 0
      %s95 = sadd.s32 %s94, 1
      %s96 = scalar_select %p93, %s94, %s95
      %p99 = pneg %p93
      %p100 = scmp.eq.s32.totalorder %s18, 1
      %p101 = por %p99, %p100
      %p102 = scmp.ne.s32.totalorder %s94, %s97
      %p103 = scmp.eq.s32.totalorder %s18, 0
      %p104 = por %p102, %p103
      %p105 = scmp.ne.s32.totalorder %s94, %s97
      %p106 = scmp.eq.s32.totalorder %s23, 1
      %p107 = por %p105, %p106
      %p108 = scmp.ne.s32.totalorder %s97, %s98
      %p109 = scmp.eq.s32.totalorder %s23, 0
      %p110 = por %p108, %p109
      %p111 = scmp.ne.s32.totalorder %s97, %s98
      %p112 = scmp.eq.s32.totalorder %s24, 1
      %p113 = por %p111, %p112
      %p115 = scmp.ne.s32.totalorder %s98, %s114
      %p116 = scmp.eq.s32.totalorder %s24, 0
      %p117 = por %p115, %p116
      %s118 = ssub.s32 %s26, %s33
      %p119 = scmp.eq.s32.totalorder %s118, 0
      %s121 = sadd.s32 %s120, 1
      %s122 = scalar_select %p119, %s120, %s121
      %p125 = pneg %p119
      %p126 = scmp.eq.s32.totalorder %s18, 1
      %p127 = por %p125, %p126
      %p128 = scmp.ne.s32.totalorder %s120, %s123
      %p129 = scmp.eq.s32.totalorder %s18, 0
      %p130 = por %p128, %p129
      %p131 = scmp.ne.s32.totalorder %s120, %s123
      %p132 = scmp.eq.s32.totalorder %s23, 1
      %p133 = por %p131, %p132
      %p134 = scmp.ne.s32.totalorder %s123, %s124
      %p135 = scmp.eq.s32.totalorder %s23, 0
      %p136 = por %p134, %p135
      %p137 = scmp.ne.s32.totalorder %s123, %s124
      %p138 = scmp.eq.s32.totalorder %s24, 1
      %p139 = por %p137, %p138
      %p141 = scmp.ne.s32.totalorder %s124, %s140
      %p142 = scmp.eq.s32.totalorder %s24, 0
      %p143 = por %p141, %p142
      %s144 = ssub.s32 %s25, %s37
      %s145 = ssub.s32 %s26, %s33
      %s146 = sor.u32 %s144, %s145
      %p147 = scmp.eq.s32.totalorder %s146, 0
      %s149 = sadd.s32 %s148, 1
      %s150 = scalar_select %p147, %s148, %s149
      %p153 = pneg %p147
      %p154 = scmp.eq.s32.totalorder %s18, 1
      %p155 = por %p153, %p154
      %p156 = scmp.ne.s32.totalorder %s148, %s151
      %p157 = scmp.eq.s32.totalorder %s18, 0
      %p158 = por %p156, %p157
      %p159 = scmp.ne.s32.totalorder %s148, %s151
      %p160 = scmp.eq.s32.totalorder %s23, 1
      %p161 = por %p159, %p160
      %p162 = scmp.ne.s32.totalorder %s151, %s152
      %p163 = scmp.eq.s32.totalorder %s23, 0
      %p164 = por %p162, %p163
      %p165 = scmp.ne.s32.totalorder %s151, %s152
      %p166 = scmp.eq.s32.totalorder %s24, 1
      %p167 = por %p165, %p166
      %p169 = scmp.ne.s32.totalorder %s152, %s168
      %p170 = scmp.eq.s32.totalorder %s24, 0
      %p171 = por %p169, %p170
      %s172 = ssub.s32 %s25, %s37
      %s173 = ssub.s32 %s26, %s33
      %s174 = sor.u32 %s172, %s173
      %p175 = scmp.eq.s32.totalorder %s174, 0
      %s177 = sadd.s32 %s176, 1
      %s178 = scalar_select %p175, %s176, %s177
      %p181 = pneg %p175
      %p182 = scmp.eq.s32.totalorder %s18, 1
      %p183 = por %p181, %p182
      %p184 = scmp.ne.s32.totalorder %s176, %s179
      %p185 = scmp.eq.s32.totalorder %s18, 0
      %p186 = por %p184, %p185
      %p187 = scmp.ne.s32.totalorder %s176, %s179
      %p188 = scmp.eq.s32.totalorder %s23, 1
      %p189 = por %p187, %p188
      %p190 = scmp.ne.s32.totalorder %s179, %s180
      %p191 = scmp.eq.s32.totalorder %s23, 0
      %p192 = por %p190, %p191
      %p193 = scmp.ne.s32.totalorder %s179, %s180
      %p194 = scmp.eq.s32.totalorder %s24, 1
      %p195 = por %p193, %p194
      %p197 = scmp.ne.s32.totalorder %s180, %s196
      %p198 = scmp.eq.s32.totalorder %s24, 0
      %p199 = por %p197, %p198
      %p200 = scmp.le.s32.totalorder 1, %s18
      %p201 = scmp.lt.s32.totalorder %s18, 3
      %p202 = pnand %p200, %p201
      %p203 = pneg %p202
      // Predicated region
      $region9: #{tpu_custom_call.1} parent=5 // pred_check
        _
      $region10: #{tpu_custom_call.1} parent=5 // pred_check_branch
        %205 = sbr.rel (%p202) target = $region12
      $region11: #{tpu_custom_call.1} parent=5 // pred_region
        %s206 = ssub.s32 %s18, 1
        // Predicated region
        $region13: #{tpu_custom_call.1} parent=11 // pred_check
          %p207 = pneg %p136
        $region14: #{tpu_custom_call.1} parent=11 // pred_check_branch
          %209 = sbr.rel (%p207) target = $region16
        $region15: #{tpu_custom_call.1} parent=11 // pred_region
          %p210 = scmp.lt.s32.totalorder %s28, 0
          %s211 = scalar_select %p210, %s28, 0
          %s212 = smul.addr %s211, 8
          %s213 = scalar_lea.vmem %s3, %s212
        $region16: #{tpu_custom_call.1} parent=11 // pred_fallthru
          _
      $region12: #{tpu_custom_call.1} parent=5 // pred_fallthru
        _
      %p214 = scmp.lt.s32.totalorder %s18, 2
      // Predicated region
      $region17: #{tpu_custom_call.1} parent=5 // pred_check
        %p215 = pneg %p214
      $region18: #{tpu_custom_call.1} parent=5 // pred_check_branch
        %217 = sbr.rel (%p215) target = $region20
      $region19: #{tpu_custom_call.1} parent=5 // pred_region
        // Predicated region
        $region21: #{tpu_custom_call.1} parent=19 // pred_check
          %p218 = pneg %p52
        $region22: #{tpu_custom_call.1} parent=19 // pred_check_branch
          %220 = sbr.rel (%p218) target = $region24
        $region23: #{tpu_custom_call.1} parent=19 // pred_region
          %p221 = scmp.lt.s32.totalorder %s25, 1
          %s222 = scalar_select %p221, %s25, 1
          %p223 = scmp.lt.s32.totalorder %s26, 0
          %s224 = scalar_select %p223, %s26, 0
          %s225 = sadd.s32 %s224, %s222
          %s226 = smul.addr %s225, 8
          %s227 = scalar_lea.vmem %s0, %s226
        $region24: #{tpu_custom_call.1} parent=19 // pred_fallthru
          _
        // Predicated region
        $region25: #{tpu_custom_call.1} parent=19 // pred_check
          %p228 = pneg %p78
        $region26: #{tpu_custom_call.1} parent=19 // pred_check_branch
          %230 = sbr.rel (%p228) target = $region28
        $region27: #{tpu_custom_call.1} parent=19 // pred_region
          %p231 = scmp.lt.s32.totalorder %s25, 1
          %s232 = scalar_select %p231, %s25, 1
          %s233 = smul.addr %s232, 16
          %s234 = smul.addr %s233, 8
          %s235 = scalar_lea.vmem %s1, %s234
        $region28: #{tpu_custom_call.1} parent=19 // pred_fallthru
          _
        // Predicated region
        $region29: #{tpu_custom_call.1} parent=19 // pred_check
          %p236 = pneg %p104
        $region30: #{tpu_custom_call.1} parent=19 // pred_check_branch
          %238 = sbr.rel (%p236) target = $region32
        $region31: #{tpu_custom_call.1} parent=19 // pred_region
          %p239 = scmp.lt.s32.totalorder %s25, 1
          %s240 = scalar_select %p239, %s25, 1
          %s241 = smul.addr %s240, 16
          %s242 = smul.addr %s241, 8
          %s243 = scalar_lea.vmem %s2, %s242
        $region32: #{tpu_custom_call.1} parent=19 // pred_fallthru
          _
      $region20: #{tpu_custom_call.1} parent=5 // pred_fallthru
        _
      %p244 = scmp.le.s32.totalorder 1, %s18
      %p245 = scmp.lt.s32.totalorder %s18, 3
      %p246 = pnand %p244, %p245
      %p247 = pneg %p246
      // Predicated region
      $region33: #{tpu_custom_call.1} parent=5 // pred_check
        _
      $region34: #{tpu_custom_call.1} parent=5 // pred_check_branch
        %249 = sbr.rel (%p246) target = $region36
      $region35: #{tpu_custom_call.1} parent=5 // pred_region
        %s250 = ssub.s32 %s18, 1
        %p251 = scmp.lt.s32.totalorder %s27, 1
        %s252 = scalar_select %p251, %s27, 1
        %p253 = scmp.lt.s32.totalorder %s28, 0
        %s254 = scalar_select %p253, %s28, 0
        %s255 = sadd.s32 %s254, %s252
        %s256 = smul.addr %s255, 8
        %s257 = scalar_lea.vmem %s0, %s256
        %p258 = pneg %p58
        %p259 = pneg %p55
        %p260 = scmp.lt.s32.totalorder %s27, 1
        %s261 = scalar_select %p260, %s27, 1
        %s262 = smul.addr %s261, 16
        %s263 = smul.addr %s262, 8
        %s264 = scalar_lea.vmem %s1, %s263
        %p265 = pneg %p84
        %p266 = pneg %p81
        %p267 = scmp.lt.s32.totalorder %s27, 1
        %s268 = scalar_select %p267, %s27, 1
        %s269 = smul.addr %s268, 16
        %s270 = smul.addr %s269, 8
        %s271 = scalar_lea.vmem %s2, %s270
        %p272 = pneg %p110
        %p273 = pneg %p107
        %p274 = scmp.lt.s32.totalorder %s28, 0
        %s275 = scalar_select %p274, %s28, 0
        %s276 = smul.addr %s275, 8
        %s277 = scalar_lea.vmem %s3, %s276
        %p278 = pneg %p136
        %p279 = pneg %p133
        %p280 = pneg %p164
        %p281 = pneg %p161
        %s282 = sand.u32 %s151, 1
        %s283 = scalar_lea.sflag [#allocation3], %s282
        %s284 = sand.u32 %s151, 1
        %s285 = smul.addr %s284, 8
        %s286 = scalar_lea.vmem [#allocation2], %s285
        %p287 = pneg %p192
        %p288 = pneg %p189
        %s289 = sand.u32 %s179, 1
        %s290 = scalar_lea.sflag [#allocation5], %s289
        %s291 = sand.u32 %s179, 1
        %s292 = smul.addr %s291, 8
        %s293 = scalar_lea.vmem [#allocation4], %s292
        %p294 = scmp.lt.s32.totalorder %s27, 1
        %s295 = scalar_select %p294, %s27, 1
        %p296 = scmp.lt.s32.totalorder %s28, 0
        %s297 = scalar_select %p296, %s28, 0
        %s298 = sadd.s32 %s297, %s295
        %s299 = smul.addr %s298, 8
        %s300 = scalar_lea.vmem %s0, %s299
        %p301 = scmp.lt.s32.totalorder %s27, 1
        %s302 = scalar_select %p301, %s27, 1
        %s303 = smul.addr %s302, 16
        %s304 = smul.addr %s303, 8
        %s305 = scalar_lea.vmem %s1, %s304
        %p306 = scmp.lt.s32.totalorder %s27, 1
        %s307 = scalar_select %p306, %s27, 1
        %s308 = smul.addr %s307, 16
        %s309 = smul.addr %s308, 8
        %s310 = scalar_lea.vmem %s2, %s309
        %p311 = scmp.lt.s32.totalorder %s28, 0
        %s312 = scalar_select %p311, %s28, 0
        %s313 = smul.addr %s312, 8
        %s314 = scalar_lea.vmem %s3, %s313
        %v315 = vld [vmem:[%s300] sm:$0xff]
        %v316 = vmul.f32 %v315, 0.17677669
        %v317 = vld [vmem:[%s305] sm:$0xff]
        %v318 = vld [vmem:[%s305 + $0x8] sm:$0xff]
        %v319 = vld [vmem:[%s305 + $0x10] sm:$0xff]
        %v320 = vld [vmem:[%s305 + $0x18] sm:$0xff]
        %v321 = vld [vmem:[%s305 + $0x20] sm:$0xff]
        %v322 = vld [vmem:[%s305 + $0x28] sm:$0xff]
        %v323 = vld [vmem:[%s305 + $0x30] sm:$0xff]
        %v324 = vld [vmem:[%s305 + $0x38] sm:$0xff]
        %v325 = vld [vmem:[%s305 + $0x40] sm:$0xff]
        %v326 = vld [vmem:[%s305 + $0x48] sm:$0xff]
        %v327 = vld [vmem:[%s305 + $0x50] sm:$0xff]
        %v328 = vld [vmem:[%s305 + $0x58] sm:$0xff]
        %v329 = vld [vmem:[%s305 + $0x60] sm:$0xff]
        %v330 = vld [vmem:[%s305 + $0x68] sm:$0xff]
        %v331 = vld [vmem:[%s305 + $0x70] sm:$0xff]
        %v332 = vld [vmem:[%s305 + $0x78] sm:$0xff]
        %v333 = vld [vmem:[%s314] sm:$0xff]
        %vm334 = vcmask 261120
        %v336 = vsel %vm334, %v316, 0
        %v339 = vsel %vm334, %v317, 0
        %v342 = vsel %vm334, %v318, 0
        %v345 = vsel %vm334, %v319, 0
        %v348 = vsel %vm334, %v320, 0
        %v351 = vsel %vm334, %v321, 0
        %v354 = vsel %vm334, %v322, 0
        %v357 = vsel %vm334, %v323, 0
        %v360 = vsel %vm334, %v324, 0
        %v363 = vsel %vm334, %v325, 0
        %v366 = vsel %vm334, %v326, 0
        %v369 = vsel %vm334, %v327, 0
        %v372 = vsel %vm334, %v328, 0
        %v375 = vsel %vm334, %v329, 0
        %v378 = vsel %vm334, %v330, 0
        %v381 = vsel %vm334, %v331, 0
        %v384 = vsel %vm334, %v332, 0
        %386 = vmatprep.subr.mxu0 0.0
        %387 = vmatpush1.xpose.msra.mxu0 %v384
        %388 = vmatprep.subr.mxu0 0.0
        %389 = vmatpush1.xpose.msra.mxu0 %v381
        %390 = vmatprep.subr.mxu0 0.0
        %391 = vmatpush1.xpose.msra.mxu0 %v378
        %392 = vmatprep.subr.mxu0 0.0
        %393 = vmatpush1.xpose.msra.mxu0 %v375
        %394 = vmatprep.subr.mxu0 0.0
        %395 = vmatpush1.xpose.msra.mxu0 %v372
        %396 = vmatprep.subr.mxu0 0.0
        %397 = vmatpush1.xpose.msra.mxu0 %v369
        %398 = vmatprep.subr.mxu0 0.0
        %399 = vmatpush1.xpose.msra.mxu0 %v366
        %400 = vmatprep.subr.mxu0 0.0
        %401 = vmatpush1.xpose.msra.mxu0 %v363
        %402 = vmatprep.subr.mxu0 0.0
        %403 = vmatpush1.xpose.msra.mxu0 %v360
        %404 = vmatprep.subr.mxu0 0.0
        %405 = vmatpush1.xpose.msra.mxu0 %v357
        %406 = vmatprep.subr.mxu0 0.0
        %407 = vmatpush1.xpose.msra.mxu0 %v354
        %408 = vmatprep.subr.mxu0 0.0
        %409 = vmatpush1.xpose.msra.mxu0 %v351
        %410 = vmatprep.subr.mxu0 0.0
        %411 = vmatpush1.xpose.msra.mxu0 %v348
        %412 = vmatprep.subr.mxu0 0.0
        %413 = vmatpush1.xpose.msra.mxu0 %v345
        %414 = vmatprep.subr.mxu0 0.0
        %415 = vmatpush1.xpose.msra.mxu0 %v342
        %416 = vmatprep.subr.mxu0 0.0
        %417 = vmatpush1.xpose.msra.mxu0 %v339
        %418 = vmatprep.subr.mxu0 0.0
        %419 = vmatpush2.xpose.msra.mxu0 0.0
        %420 = vmatprep.subr.mxu0 0.0
        %421 = vmatpush2.xpose.msra.mxu0 0.0
        %422 = vmatprep.subr.mxu0 0.0
        %423 = vmatpush2.xpose.msra.mxu0 0.0
        %424 = vmatprep.subr.mxu0 0.0
        %425 = vmatpush2.xpose.msra.mxu0 0.0
        %426 = vmatprep.subr.mxu0 0.0
        %427 = vmatpush2.xpose.msra.mxu0 0.0
        %428 = vmatprep.subr.mxu0 0.0
        %429 = vmatpush2.xpose.msra.mxu0 0.0
        %430 = vmatprep.subr.mxu0 0.0
        %431 = vmatpush2.xpose.msra.mxu0 0.0
        %432 = vmatprep.subr.mxu0 0.0
        %433 = vmatpush2.xpose.msra.mxu0 0.0
        %434 = vmatprep.subr.mxu0 0.0
        %435 = vmatpush2.xpose.msra.mxu0 0.0
        %436 = vmatprep.subr.mxu0 0.0
        %437 = vmatpush2.xpose.msra.mxu0 0.0
        %438 = vmatprep.subr.mxu0 0.0
        %439 = vmatpush2.xpose.msra.mxu0 0.0
        %440 = vmatprep.subr.mxu0 0.0
        %441 = vmatpush2.xpose.msra.mxu0 0.0
        %442 = vmatprep.subr.mxu0 0.0
        %443 = vmatpush2.xpose.msra.mxu0 0.0
        %444 = vmatprep.subr.mxu0 0.0
        %445 = vmatpush2.xpose.msra.mxu0 0.0
        %446 = vmatprep.subr.mxu0 0.0
        %447 = vmatpush2.xpose.msra.mxu0 0.0
        %448 = vmatprep.subr.mxu0 0.0
        %449 = vmatpush2.xpose.msra.mxu0 0.0
        %450 = vmatprep.mubr.f32.mxu0 0.0
        %451 = vmatmul.mubr.f32.gmra.mxu0 %v336
        %v452 = vpop.f32.mrf.mxu0
        %v453 = vadd.f32 %v333, %v452
        %v454 = vpop.f32.mrf.mxu0
        %455 = vdwg.mxu0
        %v456 = vlaneseq
        %v457 = vand.u32 %v456, 127
        %vm458 = vcmp.lt.s32.totalorder %v457, 8
        %v459 = vsel %vm458, %v453, -1e+30
        %460 = vmax.xlane.f32.xlu0 %v459
        %v461 = vpop.xlane.xlu0 %460
        %v462 = vsub.f32 %v459, %v461
        %v463 = vmul.f32 %v462, 1.442695
        %v464 = vpow.pop %v463
        %465 = vadd.xlane.f32.xlu0 %v464
        %v466 = vpop.xlane.xlu0 %465
        %v467 = vrcp.pop %v466
        %v468 = vmul.f32 %v464, %v467
        %469 = vst [vmem:[%s293] sm:$0xff] %v468
        %v470 = vld [vmem:[%s310] sm:$0xff]
        %v471 = vld [vmem:[%s310 + $0x8] sm:$0xff]
        %v472 = vld [vmem:[%s310 + $0x10] sm:$0xff]
        %v473 = vld [vmem:[%s310 + $0x18] sm:$0xff]
        %v474 = vld [vmem:[%s310 + $0x20] sm:$0xff]
        %v475 = vld [vmem:[%s310 + $0x28] sm:$0xff]
        %v476 = vld [vmem:[%s310 + $0x30] sm:$0xff]
        %v477 = vld [vmem:[%s310 + $0x38] sm:$0xff]
        %v478 = vld [vmem:[%s310 + $0x40] sm:$0xff]
        %v479 = vld [vmem:[%s310 + $0x48] sm:$0xff]
        %v480 = vld [vmem:[%s310 + $0x50] sm:$0xff]
        %v481 = vld [vmem:[%s310 + $0x58] sm:$0xff]
        %v482 = vld [vmem:[%s310 + $0x60] sm:$0xff]
        %v483 = vld [vmem:[%s310 + $0x68] sm:$0xff]
        %v484 = vld [vmem:[%s310 + $0x70] sm:$0xff]
        %v485 = vld [vmem:[%s310 + $0x78] sm:$0xff]
        %486 = vmatprep.subr.mxu0 0.0
        %487 = vmatpush1.msra.mxu0 %v485
        %488 = vmatprep.subr.mxu0 0.0
        %489 = vmatpush1.msra.mxu0 %v484
        %490 = vmatprep.subr.mxu0 0.0
        %491 = vmatpush1.msra.mxu0 %v483
        %492 = vmatprep.subr.mxu0 0.0
        %493 = vmatpush1.msra.mxu0 %v482
        %494 = vmatprep.subr.mxu0 0.0
        %495 = vmatpush1.msra.mxu0 %v481
        %496 = vmatprep.subr.mxu0 0.0
        %497 = vmatpush1.msra.mxu0 %v480
        %498 = vmatprep.subr.mxu0 0.0
        %499 = vmatpush1.msra.mxu0 %v479
        %500 = vmatprep.subr.mxu0 0.0
        %501 = vmatpush1.msra.mxu0 %v478
        %502 = vmatprep.subr.mxu0 0.0
        %503 = vmatpush1.msra.mxu0 %v477
        %504 = vmatprep.subr.mxu0 0.0
        %505 = vmatpush1.msra.mxu0 %v476
        %506 = vmatprep.subr.mxu0 0.0
        %507 = vmatpush1.msra.mxu0 %v475
        %508 = vmatprep.subr.mxu0 0.0
        %509 = vmatpush1.msra.mxu0 %v474
        %510 = vmatprep.subr.mxu0 0.0
        %511 = vmatpush1.msra.mxu0 %v473
        %512 = vmatprep.subr.mxu0 0.0
        %513 = vmatpush1.msra.mxu0 %v472
        %514 = vmatprep.subr.mxu0 0.0
        %515 = vmatpush1.msra.mxu0 %v471
        %516 = vmatprep.subr.mxu0 0.0
        %517 = vmatpush1.msra.mxu0 %v470
        %518 = vmatprep.subr.mxu0 0.0
        %519 = vmatpush2.msra.mxu0 0.0
        %520 = vmatprep.subr.mxu0 0.0
        %521 = vmatpush2.msra.mxu0 0.0
        %522 = vmatprep.subr.mxu0 0.0
        %523 = vmatpush2.msra.mxu0 0.0
        %524 = vmatprep.subr.mxu0 0.0
        %525 = vmatpush2.msra.mxu0 0.0
        %526 = vmatprep.subr.mxu0 0.0
        %527 = vmatpush2.msra.mxu0 0.0
        %528 = vmatprep.subr.mxu0 0.0
        %529 = vmatpush2.msra.mxu0 0.0
        %530 = vmatprep.subr.mxu0 0.0
        %531 = vmatpush2.msra.mxu0 0.0
        %532 = vmatprep.subr.mxu0 0.0
        %533 = vmatpush2.msra.mxu0 0.0
        %534 = vmatprep.subr.mxu0 0.0
        %535 = vmatpush2.msra.mxu0 0.0
        %536 = vmatprep.subr.mxu0 0.0
        %537 = vmatpush2.msra.mxu0 0.0
        %538 = vmatprep.subr.mxu0 0.0
        %539 = vmatpush2.msra.mxu0 0.0
        %540 = vmatprep.subr.mxu0 0.0
        %541 = vmatpush2.msra.mxu0 0.0
        %542 = vmatprep.subr.mxu0 0.0
        %543 = vmatpush2.msra.mxu0 0.0
        %544 = vmatprep.subr.mxu0 0.0
        %545 = vmatpush2.msra.mxu0 0.0
        %546 = vmatprep.subr.mxu0 0.0
        %547 = vmatpush2.msra.mxu0 0.0
        %548 = vmatprep.subr.mxu0 0.0
        %549 = vmatpush2.msra.mxu0 0.0
        %550 = vmatprep.mubr.f32.mxu0 0.0
        %551 = vmatmul.mubr.f32.gmra.mxu0 %v468
        %v552 = vpop.f32.mrf.mxu0
        %v553 = vadd.f32 0.0, %v552
        %v554 = vpop.f32.mrf.mxu0
        %555 = vdwg.mxu0
        %556 = vst.msk [vmem:[%s286] sm:$0xff] %vm334, %v553
        %s557 = sand.u32 %s151, 1
        %s558 = scalar_lea.sflag [#allocation3], %s557
        %s559 = sand.u32 %s151, 1
        %s560 = smul.addr %s559, 8
        %s561 = scalar_lea.vmem [#allocation2], %s560
        %s562 = sand.u32 %s179, 1
        %s563 = scalar_lea.sflag [#allocation5], %s562
        %s564 = sand.u32 %s179, 1
        %s565 = smul.addr %s564, 8
        %s566 = scalar_lea.vmem [#allocation4], %s565
        // Predicated region
        $region37: #{tpu_custom_call.1} parent=35 // pred_check
          %p567 = pneg %p161
        $region38: #{tpu_custom_call.1} parent=35 // pred_check_branch
          %569 = sbr.rel (%p567) target = $region40
        $region39: #{tpu_custom_call.1} parent=35 // pred_region
          %s571 = ssub.s32 128, 128
          %572 = vsyncadd %s558, %s571
          %s573 = sadd.s32 %s28, %s27
          %s574 = smul.addr %s573, 128
          %s575 = scalar_lea.hbm %s4, %s574
          %s577 = sshll.u32 %s561, 4
          %s578 = int_to_ptr.vmem [resolvable:$true] %s577
          %580 = dma.vmem_to_hbm [thread:$0]  %s578, 128, %s575, %s558
        $region40: #{tpu_custom_call.1} parent=35 // pred_fallthru
          _
        // Predicated region
        $region41: #{tpu_custom_call.1} parent=35 // pred_check
          %p581 = pneg %p189
        $region42: #{tpu_custom_call.1} parent=35 // pred_check_branch
          %583 = sbr.rel (%p581) target = $region44
        $region43: #{tpu_custom_call.1} parent=35 // pred_region
          %s585 = ssub.s32 128, 128
          %586 = vsyncadd %s563, %s585
          %s587 = sadd.s32 %s28, %s27
          %s588 = smul.addr %s587, 128
          %s589 = scalar_lea.hbm %s5, %s588
          %s591 = sshll.u32 %s566, 4
          %s592 = int_to_ptr.vmem [resolvable:$true] %s591
          %594 = dma.vmem_to_hbm [thread:$0]  %s592, 128, %s589, %s563
        $region44: #{tpu_custom_call.1} parent=35 // pred_fallthru
          _
      $region36: #{tpu_custom_call.1} parent=5 // pred_fallthru
        _
      %p595 = scmp.le.s32.totalorder 2, %s18
      // Predicated region
      $region45: #{tpu_custom_call.1} parent=5 // pred_check
        %p596 = pneg %p595
      $region46: #{tpu_custom_call.1} parent=5 // pred_check_branch
        %598 = sbr.rel (%p596) target = $region48
      $region47: #{tpu_custom_call.1} parent=5 // pred_region
        %s599 = ssub.s32 %s18, 2
        // Predicated region
        $region49: #{tpu_custom_call.1} parent=47 // pred_check
          %p600 = pneg %p167
        $region50: #{tpu_custom_call.1} parent=47 // pred_check_branch
          %602 = sbr.rel (%p600) target = $region52
        $region51: #{tpu_custom_call.1} parent=47 // pred_region
          %s603 = sand.u32 %s152, 1
          %s604 = scalar_lea.sflag [#allocation3], %s603
          %s605 = sand.u32 %s152, 1
          %s606 = smul.addr %s605, 8
          %s607 = scalar_lea.vmem [#allocation2], %s606
          %608 = dma.done %s604, 128
        $region52: #{tpu_custom_call.1} parent=47 // pred_fallthru
          _
        // Predicated region
        $region53: #{tpu_custom_call.1} parent=47 // pred_check
          %p609 = pneg %p195
        $region54: #{tpu_custom_call.1} parent=47 // pred_check_branch
          %611 = sbr.rel (%p609) target = $region56
        $region55: #{tpu_custom_call.1} parent=47 // pred_region
          %s612 = sand.u32 %s180, 1
          %s613 = scalar_lea.sflag [#allocation5], %s612
          %s614 = sand.u32 %s180, 1
          %s615 = smul.addr %s614, 8
          %s616 = scalar_lea.vmem [#allocation4], %s615
          %617 = dma.done %s613, 128
        $region56: #{tpu_custom_call.1} parent=47 // pred_fallthru
          _
      $region48: #{tpu_custom_call.1} parent=5 // pred_fallthru
        _
    $region6: #{tpu_custom_call.1} parent=1 // loop_footer
      %s22 = sadd.s32 1, %s18
    $region7: #{tpu_custom_call.1} parent=1 // loop_footer_branch
      %17 = sbr.rel target = $region3
    $region8: #{tpu_custom_call.1} parent=1 // loop_exit
      _
    %618 = vsyncpa [#allocation3], 1
    %s619 = scalar_lea.sflag [#allocation3], 1
    %620 = vsyncpa %s619, 1
    %621 = vsyncpa [#allocation5], 1
    %s622 = scalar_lea.sflag [#allocation5], 1
    %623 = vsyncpa %s622, 1

</llo_original>
